<compile_context>
chip_gen: v7x
topology: tpu7x:2x2x1
jax: 0.10.0
libtpu: 0.0.40
codegen_flags: <defaults>
</compile_context>

<pallas_src>
import math

import jax
import jax.numpy as jnp
from jax import lax
from jax.experimental import pallas as pl
from jax.experimental.pallas import tpu as pltpu

_MIB = 1024 * 1024
_MAX_FOLD_WIDTH = 512            # cap on F*D (keeps block-diag FLOP waste irrelevant)
_VMEM_LIMIT_BYTES = 32 * _MIB    # fits every generation, incl. v7x (64 MiB physical)


def _device_kind() -> str:
    try:
        return jax.devices()[0].device_kind.lower()
    except Exception:  # defensive: never let a query break the kernel path
        return ""


def _target_block_bytes() -> int:
    """Per-pipeline-buffer byte budget (x block + its output slab).

    v7x streams HBM at ~3.2 TB/s per TC, so the ~0.35us grid-step overhead is
    only amortized with ~8 MiB blocks; 4 MiB keeps v5e/v6e near their HBM
    roofline while staying small relative to VMEM.
    """
    return 8 * _MIB if "v7" in _device_kind() else 4 * _MIB


def _sublane_packing(itemsize: int) -> int:
    # f32 -> 8 rows per packed sublane group, bf16 -> 16, int8/fp8 -> 32.
    return {4: 8, 2: 16, 1: 32}.get(int(itemsize), 8)


def _choose_fold(d: int) -> int:
    """Rows folded into the lane axis (x -> (N/F, F*D), W -> block-diag (F, F*D)).

    Prefer F*D a multiple of 128 (lane-dense x loads), bumped toward >= 256
    (fills the v6e/v7x MXU, denser output tile), capped at 512.
    """
    if d >= _MAX_FOLD_WIDTH:
        return 1
    lane_aligned = d // math.gcd(d, 128) * 128       # lcm(d, 128)
    if lane_aligned <= _MAX_FOLD_WIDTH:
        width = lane_aligned
        while width < 256 and width * 2 <= _MAX_FOLD_WIDTH:
            width *= 2
        return width // d
    # No 128-multiple width fits under the cap: pack as many rows as fit.
    return max(1, _MAX_FOLD_WIDTH // d)


def _choose_tile_rows(r: int, bytes_per_row: int, sublane: int, block_bytes: int):
    """Largest sublane-aligned row tile with <= block_bytes per pipeline buffer."""
    t = max(sublane, block_bytes // max(int(bytes_per_row), 1))
    t = max(sublane, (t // sublane) * sublane)
    if t >= r:
        return r, 1                       # single block == full array dims (legal)
    return t, pl.cdiv(r, t)               # ragged last block is masked by Pallas


def _linear_kernel(x_ref, w_ref, b_ref, o_ref):
    # x_ref: (TILE_R, F*D) VMEM   w_ref: (F, F*D) VMEM (grid-resident)
    # b_ref: (1, 1) SMEM          o_ref: (TILE_R, F) VMEM
    acc = lax.dot_general(
        x_ref[...],
        w_ref[...],
        dimension_numbers=(((1,), (1,)), ((), ())),   # contract the F*D axis
        preferred_element_type=jnp.float32,
    )
    o_ref[...] = (acc + b_ref[0, 0]).astype(o_ref.dtype)


def _xla_linear(x, weight, bias):
    """Exact-f32 fallback (broadcast mul + sum; no MXU default-precision ambiguity)."""
    return (jnp.sum(x * weight.reshape(1, -1), axis=1, keepdims=True) + bias).astype(x.dtype)


def _linear_forward_pallas(x, weight, bias, *, block_bytes=None):
    """x: (N, D), weight: (1, D), bias: (1,)  ->  (N, 1)."""
    n, d = x.shape
    dtype = x.dtype
    itemsize = jnp.dtype(dtype).itemsize
    weight = weight.astype(dtype)
    if block_bytes is None:
        block_bytes = _target_block_bytes()

    f = _choose_fold(d)
    n_main = (n // f) * f
    if n_main == 0:
        # Fewer rows than one fold group: not worth a kernel launch.
        return _xla_linear(x, weight, bias)

    width = f * d
    r = n_main // f

    # Contiguous (N, D) -> (R, F*D) reshape is a layout bitcast (no HBM copy).
    x_main = x if n_main == n else x[:n_main]
    x_fold = x_main.reshape(r, width)
    w_fold = (
        jnp.kron(jnp.eye(f, dtype=weight.dtype), weight.reshape(1, d))
        if f > 1
        else weight.reshape(1, d)
    )
    b_smem = bias.reshape(1, 1).astype(jnp.float32)

    sublane = _sublane_packing(itemsize)
    # Budget covers the x block plus its (small) output slab so even tiny-D
    # shapes keep two double-buffered blocks inside the VMEM limit.
    tile_r, grid = _choose_tile_rows(r, (width + f) * itemsize, sublane, block_bytes)

    cost = pl.CostEstimate(
        # MXU flops actually issued (block-diagonal trick does F x the useful work).
        flops=2 * r * width * f,
        transcendentals=0,
        bytes_accessed=int((x_fold.size + w_fold.size + r * f) * itemsize + 4),
    )

    out_fold = pl.pallas_call(
        _linear_kernel,
        out_shape=jax.ShapeDtypeStruct((r, f), dtype),
        grid_spec=pltpu.PrefetchScalarGridSpec(
            num_scalar_prefetch=0,
            grid=(grid,),
            in_specs=[
                pl.BlockSpec((tile_r, width), lambda i: (i, 0)),
                pl.BlockSpec((f, width), lambda i: (0, 0)),         # resident weight
                pl.BlockSpec(memory_space=pltpu.MemorySpace.SMEM),   # scalar bias
            ],
            out_specs=pl.BlockSpec((tile_r, f), lambda i: (i, 0)),
        ),
        compiler_params=pltpu.CompilerParams(
            dimension_semantics=("parallel",),   # row axis can shard across v7x's 2 TCs
            vmem_limit_bytes=_VMEM_LIMIT_BYTES,
        ),
        cost_estimate=cost,
    )(x_fold, w_fold, b_smem)

    out_main = out_fold.reshape(n_main, 1)
    if n_main == n:
        return out_main
    # <F leftover rows: tiny XLA epilogue instead of a padded copy of x.
    # TODO(synk): a fully zero-copy ragged tail would need manual DMA on the flat buffer.
    tail = _xla_linear(x[n_main:], weight, bias)
    return jnp.concatenate([out_main, tail], axis=0)


def linear_model_forward(x, weight, bias, *, min_bytes_for_pallas=None):
    """LinearModel.forward.  Small inputs go to plain XLA: at ~1 MiB the whole
    job is a microsecond of HBM traffic and Pallas launch / grid-step overhead
    would be a regression (threshold is bandwidth-aware, higher on v7x)."""
    if min_bytes_for_pallas is None:
        min_bytes_for_pallas = 4 * _MIB if "v7" in _device_kind() else 1 * _MIB
    n, d = x.shape
    if n * d * jnp.dtype(x.dtype).itemsize < min_bytes_for_pallas:
        return _xla_linear(x, weight, bias)
    return _linear_forward_pallas(x, weight, bias)


if __name__ == "__main__":
    key = jax.random.PRNGKey(0)
    batch, input_dim = 8, 32

    x = jax.random.normal(key, (batch, input_dim), dtype=jnp.float32)
    # Deterministic parameter init, matching nn.init.constant_ in __init__.
    weight = jnp.full((1, input_dim), 1.0 / input_dim, dtype=jnp.float32)
    bias = jnp.zeros((1,), dtype=jnp.float32)

    out = jax.block_until_ready(_linear_forward_pallas(x, weight, bias))
    ref = _xla_linear(x, weight, bias)
    assert out.shape == (batch, 1)
    assert jnp.allclose(out, ref, atol=1e-4), "mismatch vs reference (small)"

    # Exercise the remaining code paths at modest sizes:
    #   (8200, 32): F=8, N % F == 0 (zero-copy), single big block
    #   (8199, 32): ragged tail (7 rows) -> Pallas prefix + XLA epilogue
    #   (64, 48):   D does not divide 128 -> F=8, lane-aligned width 384
    #   (50, 100):  lcm(D,128) > 512 -> F=5, non-128-multiple full-width block
    #   (4104, 32) + tiny block budget: multi-step grid with ragged last block
    cases = [
        (8200, 32, None),
        (8199, 32, None),
        (64, 48, None),
        (50, 100, None),
        (4104, 32, 64 * 1024),
    ]
    for case_idx, (n2, d2, bb) in enumerate(cases):
        k2 = jax.random.PRNGKey(case_idx + 1)
        x2 = jax.random.normal(k2, (n2, d2), dtype=jnp.float32)
        w2 = jnp.full((1, d2), 1.0 / d2, dtype=jnp.float32)
        b2 = jnp.full((1,), 0.25, dtype=jnp.float32)
        o2 = jax.block_until_ready(_linear_forward_pallas(x2, w2, b2, block_bytes=bb))
        r2 = _xla_linear(x2, w2, b2)
        assert o2.shape == (n2, 1)
        assert jnp.allclose(o2, r2, atol=1e-4), f"mismatch vs reference {(n2, d2)}"

    # Dispatcher sanity: small batches take the plain-XLA path.
    out_disp = jax.block_until_ready(linear_model_forward(x, weight, bias))
    assert jnp.allclose(out_disp, ref, atol=1e-4)

    print("KERNEL_OK")
</pallas_src>

<mosaic_0001>
module attributes {stable_mosaic.version = 11 : i64} {
  func.func @_linear_kernel(%arg0: i32, %arg1: memref<1x256xf32, #tpu.memory_space<vmem>>, %arg2: memref<8x256xf32, #tpu.memory_space<vmem>>, %arg3: memref<1x1xf32, #tpu.memory_space<smem>>, %arg4: memref<1x8xf32, #tpu.memory_space<vmem>>) attributes {dimension_semantics = [#tpu.dimension_semantics<parallel>], iteration_bounds = array<i64: 1>, scalar_prefetch = 0 : i64, scratch_operands = 0 : i64, tpu.core_type = #tpu.core_type<tc>, window_params = [{transform_indices = @transform_0, window_bounds = array<i64: 1, 256>}, {pipeline_mode = #tpu.pipeline_mode<synchronous>, transform_indices = @transform_1, window_bounds = array<i64: 8, 256>}, {transform_indices = @transform_2, window_bounds = array<i64: 1, 1>}, {transform_indices = @transform_3, window_bounds = array<i64: 1, 8>}]} {
    %c0 = arith.constant 0 : index
    %c0_0 = arith.constant 0 : index
    %0 = vector.load %arg1[%c0, %c0_0] : memref<1x256xf32, #tpu.memory_space<vmem>>, vector<1x256xf32>
    %c0_1 = arith.constant 0 : index
    %c0_2 = arith.constant 0 : index
    %1 = vector.load %arg2[%c0_1, %c0_2] : memref<8x256xf32, #tpu.memory_space<vmem>>, vector<8x256xf32>
    %cst = arith.constant dense<0.000000e+00> : vector<1x8xf32>
    %2 = tpu.matmul %0, %1, %cst {dimension_numbers = #tpu.dot_dimension_numbers<[1], [1], [0], [0], [0, 0, 1, 0], [], []>} : vector<1x256xf32>, vector<8x256xf32>, vector<1x8xf32> -> vector<1x8xf32>
    %c0_3 = arith.constant 0 : index
    %c0_4 = arith.constant 0 : index
    %3 = memref.load %arg3[%c0_3, %c0_4] : memref<1x1xf32, #tpu.memory_space<smem>>
    %4 = vector.broadcast %3 : f32 to vector<1x8xf32>
    %5 = arith.addf %2, %4 : vector<1x8xf32>
    %c0_5 = arith.constant 0 : index
    %c0_6 = arith.constant 0 : index
    %6 = vector.load %arg4[%c0_5, %c0_6] : memref<1x8xf32, #tpu.memory_space<vmem>>, vector<1x8xf32>
    tpu.vector_store %arg4[%c0_5, %c0_6], %5 {strides = array<i32>} : memref<1x8xf32, #tpu.memory_space<vmem>>, vector<1x8xf32>,
    return
  }
  func.func @transform_0(%arg0: i32) -> (i32, i32) {
    %c0_i32 = arith.constant 0 : i32
    %c0_i32_0 = arith.constant 0 : i32
    return %arg0, %c0_i32 : i32, i32
  }
  func.func @transform_1(%arg0: i32) -> (i32, i32) {
    %c0_i32 = arith.constant 0 : i32
    %c0_i32_0 = arith.constant 0 : i32
    %c0_i32_1 = arith.constant 0 : i32
    return %c0_i32, %c0_i32_0 : i32, i32
  }
  func.func @transform_2(%arg0: i32) -> (i32, i32) {
    %c0_i32 = arith.constant 0 : i32
    %c0_i32_0 = arith.constant 0 : i32
    %c0_i32_1 = arith.constant 0 : i32
    return %c0_i32, %c0_i32_0 : i32, i32
  }
  func.func @transform_3(%arg0: i32) -> (i32, i32) {
    %c0_i32 = arith.constant 0 : i32
    %c0_i32_0 = arith.constant 0 : i32
    return %arg0, %c0_i32 : i32, i32
  }
}

</mosaic_0001>

<llo_original>
// kernel: tpu_custom_call.1
$region0: #{tpu_custom_call.1}
  #allocation0 [shape = 'u32[]', space=smem, size = 0x4, offset = 0x4, fixed_abs, tag = 'smem constant byte address 0x4 - core index']
  #allocation1 [shape = 'u32[144,128]{1,0:T(1,128)}', space=vmem, size = 0x12000, scoped, tag = 'internal scratch']
  #allocation2 [shape = 'f32[1,1]{1,0:T(1,128)S(6)}', space=smem, size = 0x200, scoped, tag = 'scoped memory for tpu_custom_call.1']
  %s0 = inlined_call_operand.vmem [shape: f32[1,256], index: 0, kind: input, shape index: {}]
  %s1 = inlined_call_operand.hbm [shape: f32[8,256], index: 1, kind: input, shape index: {}]
  %s2 = inlined_call_operand.<no memory space> [shape: f32[1,1], index: 2, kind: input, shape index: {}]
  %s3 = inlined_call_operand.hbm [shape: f32[1,8], index: 3, kind: output, shape index: {}]
  %s4 = sld [smem:[#allocation0]]
  $region26: #{tpu_custom_call.1} parent=0
    _
  %s6 = ssub.s32 1, %s4
  %s7 = scalar_select 0, %s6, %s4
  %8 = sst [smem:[#allocation2]] %s2
  $region1: #{tpu_custom_call.1} parent=0
    #allocation3 [shape = 'u8[8192]{0}', space=vmem, size = 0x2000, scoped, tag = 'input window, operand 1, single buffered']
    #allocation4 [shape = 's32[1]{0}', space=sflag, size = 0x4, scoped, tag = 'scoped memory for tpu_custom_call.1']
    #allocation5 [shape = 's32[1]{0}', space=sflag, size = 0x4, scoped, tag = 'scoped memory for tpu_custom_call.1']
    #allocation6 [shape = 'u8[512]{0}', space=vmem, size = 0x400, scoped, tag = 'output window, operand 0, single buffered']
    %9 = vsyncpa [#allocation4], 0
    %10 = vsyncpa [#allocation5], 0
    // Predicated region
    $region2: #{tpu_custom_call.1} parent=1 // pred_check
      _
    $region3: #{tpu_custom_call.1} parent=1 // pred_check_branch
      %12 = sbr.rel (0) target = $region5
    $region4: #{tpu_custom_call.1} parent=1 // pred_region
      _
    $region5: #{tpu_custom_call.1} parent=1 // pred_fallthru
      _
    // Predicated region
    $region6: #{tpu_custom_call.1} parent=1 // pred_check
      _
    $region7: #{tpu_custom_call.1} parent=1 // pred_check_branch
      %14 = sbr.rel (0) target = $region9
    $region8: #{tpu_custom_call.1} parent=1 // pred_region
      %s16 = ssub.s32 256, 256
      %17 = vsyncadd [#allocation4], %s16
      %s19 = sshll.u32 [#allocation3], 4
      %s20 = int_to_ptr.vmem [resolvable:$true] %s19
      %22 = dma.hbm_to_vmem [thread:$0]  %s1, 256, %s20, [#allocation4]
    $region9: #{tpu_custom_call.1} parent=1 // pred_fallthru
      _
    // Predicated region
    $region10: #{tpu_custom_call.1} parent=1 // pred_check
      _
    $region11: #{tpu_custom_call.1} parent=1 // pred_check_branch
      %24 = sbr.rel (0) target = $region13
    $region12: #{tpu_custom_call.1} parent=1 // pred_region
      _
    $region13: #{tpu_custom_call.1} parent=1 // pred_fallthru
      _
    // Predicated region
    $region14: #{tpu_custom_call.1} parent=1 // pred_check
      _
    $region15: #{tpu_custom_call.1} parent=1 // pred_check_branch
      %26 = sbr.rel (0) target = $region17
    $region16: #{tpu_custom_call.1} parent=1 // pred_region
      %27 = dma.done [#allocation4], 256
    $region17: #{tpu_custom_call.1} parent=1 // pred_fallthru
      _
    %v28 = vld [vmem:[%s0] sm:$0x3]
    %v29 = vld [vmem:[#allocation3] sm:$0xff]
    %v30 = vld [vmem:[#allocation3 + $0x8] sm:$0xff]
    %s31 = sld [smem:[#allocation2]]
    %v32 = vstv %s31
    %v34 = vlaneseq
    %v35 = vshrl.u32 %v34, 7
    %v36 = vsub.s32 0, %v35
    %v37 = vrot.slane %v28, %v36
    %v38 = vlaneseq
    %v39 = vshrl.u32 %v38, 7
    %v40 = vsub.s32 1, %v39
    %v41 = vrot.slane %v28, %v40
    %44 = vmatprep.subr.mxu0 %v30
    %45 = vmatpush1.xpose.msra.mxu0 %v29
    %46 = vmatprep.subr.mxu0 0.0
    %47 = vmatpush1.xpose.msra.mxu0 0.0
    %48 = vmatprep.subr.mxu0 0.0
    %49 = vmatpush1.xpose.msra.mxu0 0.0
    %50 = vmatprep.subr.mxu0 0.0
    %51 = vmatpush1.xpose.msra.mxu0 0.0
    %52 = vmatprep.subr.mxu0 0.0
    %53 = vmatpush1.xpose.msra.mxu0 0.0
    %54 = vmatprep.subr.mxu0 0.0
    %55 = vmatpush1.xpose.msra.mxu0 0.0
    %56 = vmatprep.subr.mxu0 0.0
    %57 = vmatpush1.xpose.msra.mxu0 0.0
    %58 = vmatprep.subr.mxu0 0.0
    %59 = vmatpush1.xpose.msra.mxu0 0.0
    %60 = vmatprep.subr.mxu0 0.0
    %61 = vmatpush1.xpose.msra.mxu0 0.0
    %62 = vmatprep.subr.mxu0 0.0
    %63 = vmatpush1.xpose.msra.mxu0 0.0
    %64 = vmatprep.subr.mxu0 0.0
    %65 = vmatpush1.xpose.msra.mxu0 0.0
    %66 = vmatprep.subr.mxu0 0.0
    %67 = vmatpush1.xpose.msra.mxu0 0.0
    %68 = vmatprep.subr.mxu0 0.0
    %69 = vmatpush1.xpose.msra.mxu0 0.0
    %70 = vmatprep.subr.mxu0 0.0
    %71 = vmatpush1.xpose.msra.mxu0 0.0
    %72 = vmatprep.subr.mxu0 0.0
    %73 = vmatpush1.xpose.msra.mxu0 0.0
    %74 = vmatprep.subr.mxu0 0.0
    %75 = vmatpush1.xpose.msra.mxu0 0.0
    %76 = vmatprep.subr.mxu0 0.0
    %77 = vmatpush1.xpose.msra.mxu0 0.0
    %78 = vmatprep.subr.mxu0 0.0
    %79 = vmatpush1.xpose.msra.mxu0 0.0
    %80 = vmatprep.subr.mxu0 0.0
    %81 = vmatpush1.xpose.msra.mxu0 0.0
    %82 = vmatprep.subr.mxu0 0.0
    %83 = vmatpush1.xpose.msra.mxu0 0.0
    %84 = vmatprep.subr.mxu0 0.0
    %85 = vmatpush1.xpose.msra.mxu0 0.0
    %86 = vmatprep.subr.mxu0 0.0
    %87 = vmatpush1.xpose.msra.mxu0 0.0
    %88 = vmatprep.subr.mxu0 0.0
    %89 = vmatpush1.xpose.msra.mxu0 0.0
    %90 = vmatprep.subr.mxu0 0.0
    %91 = vmatpush1.xpose.msra.mxu0 0.0
    %92 = vmatprep.subr.mxu0 0.0
    %93 = vmatpush1.xpose.msra.mxu0 0.0
    %94 = vmatprep.subr.mxu0 0.0
    %95 = vmatpush1.xpose.msra.mxu0 0.0
    %96 = vmatprep.subr.mxu0 0.0
    %97 = vmatpush1.xpose.msra.mxu0 0.0
    %98 = vmatprep.subr.mxu0 0.0
    %99 = vmatpush1.xpose.msra.mxu0 0.0
    %100 = vmatprep.subr.mxu0 0.0
    %101 = vmatpush1.xpose.msra.mxu0 0.0
    %102 = vmatprep.subr.mxu0 0.0
    %103 = vmatpush1.xpose.msra.mxu0 0.0
    %104 = vmatprep.subr.mxu0 0.0
    %105 = vmatpush1.xpose.msra.mxu0 0.0
    %106 = vmatprep.subr.mxu0 0.0
    %107 = vmatpush1.xpose.msra.mxu0 0.0
    %108 = vmatprep.mubr.f32.mxu0 %v41
    %109 = vmatmul.mubr.f32.gmra.mrb[0].mxu0 %v37
    %v110 = vpop.f32.mrb[0].mxu0
    %v111 = vadd.f32 %v32, %v110
    %v112 = vpop.f32.mrb[0].mxu0
    %113 = vdwg.mxu0
    %vm114 = vcmask 57344
    %115 = vst.msk [vmem:[#allocation6] sm:$0x1] %vm114, %v111
    // Predicated region
    $region18: #{tpu_custom_call.1} parent=1 // pred_check
      _
    $region19: #{tpu_custom_call.1} parent=1 // pred_check_branch
      %117 = sbr.rel (0) target = $region21
    $region20: #{tpu_custom_call.1} parent=1 // pred_region
      %s119 = ssub.s32 16, 16
      %120 = vsyncadd [#allocation5], %s119
      %s122 = sshll.u32 [#allocation6], 4
      %s123 = int_to_ptr.vmem [resolvable:$true] %s122
      %125 = dma.vmem_to_hbm [thread:$0]  %s123, 16, %s3, [#allocation5]
    $region21: #{tpu_custom_call.1} parent=1 // pred_fallthru
      _
    // Predicated region
    $region22: #{tpu_custom_call.1} parent=1 // pred_check
      _
    $region23: #{tpu_custom_call.1} parent=1 // pred_check_branch
      %127 = sbr.rel (0) target = $region25
    $region24: #{tpu_custom_call.1} parent=1 // pred_region
      %128 = dma.done [#allocation5], 16
    $region25: #{tpu_custom_call.1} parent=1 // pred_fallthru
      _
    %129 = vsyncpa [#allocation4], 1
    %130 = vsyncpa [#allocation5], 1

</llo_original>
